<compile_context>
chip_gen: v7x
topology: tpu7x:2x2x1
jax: 0.10.0
libtpu: 0.0.40
codegen_flags: <defaults>
</compile_context>

<pallas_src>
import functools

import jax
import jax.numpy as jnp
from jax.experimental import pallas as pl
from jax.experimental.pallas import tpu as pltpu


def _kl_distill_kernel(logits_ref, targets_ref, out_ref, *, inv_t, total_rows, tb):
    """One batch tile: writes the (unnormalized) partial KL sum for this tile."""
    i = pl.program_id(0)

    x = logits_ref[...].astype(jnp.float32) * inv_t   # student logits / T
    y = targets_ref[...].astype(jnp.float32) * inv_t  # teacher logits / T

    # Student log_softmax over the class (lane) axis.
    x_max = jnp.max(x, axis=1, keepdims=True)
    x_sh = x - x_max
    log_q = x_sh - jnp.log(jnp.sum(jnp.exp(x_sh), axis=1, keepdims=True))

    # Teacher softmax, kept factored: p = ey / sy, log_p = y_sh - log(sy).
    y_max = jnp.max(y, axis=1, keepdims=True)
    y_sh = y - y_max
    ey = jnp.exp(y_sh)
    sy = jnp.sum(ey, axis=1, keepdims=True)
    log_p = y_sh - jnp.log(sy)

    # sum_c p * (log_p - log_q) = (sum_c ey * (log_p - log_q)) / sy
    # -> only one divide per *row* instead of one per element.
    num = jnp.sum(ey * (log_p - log_q), axis=1, keepdims=True)  # (tb, 1)
    row_kl = num / sy                                           # (tb, 1)

    # Mask rows belonging to padding of a partial final tile.
    row_idx = jax.lax.broadcasted_iota(jnp.int32, (tb, 1), 0) + i * tb
    row_kl = jnp.where(row_idx < total_rows, row_kl, 0.0)

    tile_sum = jnp.sum(row_kl, axis=0, keepdims=True)           # (1, 1)
    out_ref[...] = tile_sum.reshape(1, 1, 1)


def _pick_block_rows(batch, classes, itemsize, block_rows=None):
    """Choose a batch-tile size that keeps the VMEM footprint v7x-safe."""
    if block_rows is None:
        budget = 40 * 1024 * 1024
        # 2 inputs x 2 pipeline buffers (input dtype) + ~6 live f32 intermediates.
        per_row = classes * (4 * itemsize + 6 * 4)
        block_rows = max(8, min(1024, (budget // max(per_row, 1)) // 8 * 8))
    if batch <= block_rows:
        return batch                      # single full-B tile (any B, incl. B < 8)
    return max(8, (block_rows // 8) * 8)  # multi-tile: keep sublane dim 8-aligned


def distillation_loss(logits, targets, temperature=2.0, block_rows=None):
    """Pallas implementation of DistilationLoss.forward (batchmean KL)."""
    assert logits.shape == targets.shape and logits.ndim == 2
    B, C = logits.shape
    inv_t = 1.0 / float(temperature)      # folded at trace time (no SMEM read)

    tb = _pick_block_rows(B, C, jnp.dtype(logits.dtype).itemsize, block_rows)
    num_tiles = pl.cdiv(B, tb)

    kernel = functools.partial(_kl_distill_kernel, inv_t=inv_t, total_rows=B, tb=tb)

    partials = pl.pallas_call(
        kernel,
        out_shape=jax.ShapeDtypeStruct((num_tiles, 1, 1), jnp.float32),
        grid=(num_tiles,),
        in_specs=[
            pl.BlockSpec((tb, C), lambda i: (i, 0)),   # logits tile
            pl.BlockSpec((tb, C), lambda i: (i, 0)),   # targets tile
        ],
        out_specs=pl.BlockSpec((1, 1, 1), lambda i: (i, 0, 0)),
        compiler_params=pltpu.CompilerParams(
            dimension_semantics=("parallel",),          # v7x: shard tiles over 2 TCs
            vmem_limit_bytes=48 * 1024 * 1024,          # > v5e 16 MiB default, < v7x 64 MiB
        ),
    )(logits, targets)

    return jnp.sum(partials) / jnp.float32(B)           # 'batchmean'


def _reference_loss(logits, targets, temperature=2.0):
    lsp = jax.nn.log_softmax(logits.astype(jnp.float32) / temperature, axis=1)
    lst = jax.nn.log_softmax(targets.astype(jnp.float32) / temperature, axis=1)
    p = jnp.exp(lst)
    return jnp.sum(p * (lst - lsp)) / logits.shape[0]


if __name__ == "__main__":
    key = jax.random.PRNGKey(0)
    k1, k2, k3, k4 = jax.random.split(key, 4)

    # Small test consistent with the module: a batch of (B, C) logit rows.
    B, C = 8, 32
    logits = jax.random.normal(k1, (B, C), dtype=jnp.float32)
    targets = jax.random.normal(k2, (B, C), dtype=jnp.float32)

    loss = jax.block_until_ready(distillation_loss(logits, targets, temperature=2.0))
    ref = _reference_loss(logits, targets, temperature=2.0)
    assert jnp.allclose(loss, ref, atol=1e-5, rtol=1e-5), (loss, ref)

    # Multi-tile + partial-tile masking path (B=20 with 8-row tiles -> grid of 3).
    B2, C2 = 20, 32
    lg2 = jax.random.normal(k3, (B2, C2), dtype=jnp.float32)
    tg2 = jax.random.normal(k4, (B2, C2), dtype=jnp.float32)
    loss2 = jax.block_until_ready(
        distillation_loss(lg2, tg2, temperature=3.0, block_rows=8))
    ref2 = _reference_loss(lg2, tg2, temperature=3.0)
    assert jnp.allclose(loss2, ref2, atol=1e-5, rtol=1e-5), (loss2, ref2)

    # bf16 inputs: half the HBM bytes, math stays f32 inside the kernel.
    loss3 = jax.block_until_ready(
        distillation_loss(lg2.astype(jnp.bfloat16), tg2.astype(jnp.bfloat16),
                          temperature=2.0, block_rows=8))
    ref3 = _reference_loss(lg2.astype(jnp.bfloat16), tg2.astype(jnp.bfloat16),
                           temperature=2.0)
    assert jnp.allclose(loss3, ref3, atol=1e-2, rtol=1e-2), (loss3, ref3)

    print("KERNEL_OK")
</pallas_src>

<mosaic_0001>
module attributes {stable_mosaic.version = 11 : i64} {
  func.func @_kl_distill_kernel(%arg0: i32, %arg1: memref<8x32xf32, #tpu.memory_space<vmem>>, %arg2: memref<8x32xf32, #tpu.memory_space<vmem>>, %arg3: memref<1x1x1xf32, #tpu.memory_space<vmem>>) attributes {dimension_semantics = [#tpu.dimension_semantics<parallel>], iteration_bounds = array<i64: 1>, scalar_prefetch = 0 : i64, scratch_operands = 0 : i64, tpu.core_type = #tpu.core_type<tc>, window_params = [{transform_indices = @transform_0, window_bounds = array<i64: 8, 32>}, {transform_indices = @transform_1, window_bounds = array<i64: 8, 32>}, {transform_indices = @transform_2, window_bounds = array<i64: 1, 1, 1>}]} {
    %c0 = arith.constant 0 : index
    %c0_0 = arith.constant 0 : index
    %0 = vector.load %arg1[%c0, %c0_0] : memref<8x32xf32, #tpu.memory_space<vmem>>, vector<8x32xf32>
    %cst = arith.constant 5.000000e-01 : f32
    %1 = vector.broadcast %cst : f32 to vector<8x32xf32>
    %2 = arith.mulf %0, %1 : vector<8x32xf32>
    %c0_1 = arith.constant 0 : index
    %c0_2 = arith.constant 0 : index
    %3 = vector.load %arg2[%c0_1, %c0_2] : memref<8x32xf32, #tpu.memory_space<vmem>>, vector<8x32xf32>
    %cst_3 = arith.constant 5.000000e-01 : f32
    %4 = vector.broadcast %cst_3 : f32 to vector<8x32xf32>
    %5 = arith.mulf %3, %4 : vector<8x32xf32>
    %cst_4 = arith.constant dense<0xFF800000> : vector<8xf32>
    %6 = vector.multi_reduction <maximumf>, %2, %cst_4 [1] : vector<8x32xf32> to vector<8xf32>
    %7 = vector.shape_cast %6 : vector<8xf32> to vector<8x1xf32>
    %8 = vector.broadcast %7 : vector<8x1xf32> to vector<8x32xf32>
    %9 = arith.subf %2, %8 : vector<8x32xf32>
    %10 = math.exp %9 : vector<8x32xf32>
    %cst_5 = arith.constant dense<0.000000e+00> : vector<8xf32>
    %11 = vector.multi_reduction <add>, %10, %cst_5 [1] : vector<8x32xf32> to vector<8xf32>
    %12 = vector.shape_cast %11 : vector<8xf32> to vector<8x1xf32>
    %13 = math.log %12 : vector<8x1xf32>
    %14 = vector.broadcast %13 : vector<8x1xf32> to vector<8x32xf32>
    %15 = arith.subf %9, %14 : vector<8x32xf32>
    %cst_6 = arith.constant dense<0xFF800000> : vector<8xf32>
    %16 = vector.multi_reduction <maximumf>, %5, %cst_6 [1] : vector<8x32xf32> to vector<8xf32>
    %17 = vector.shape_cast %16 : vector<8xf32> to vector<8x1xf32>
    %18 = vector.broadcast %17 : vector<8x1xf32> to vector<8x32xf32>
    %19 = arith.subf %5, %18 : vector<8x32xf32>
    %20 = math.exp %19 : vector<8x32xf32>
    %cst_7 = arith.constant dense<0.000000e+00> : vector<8xf32>
    %21 = vector.multi_reduction <add>, %20, %cst_7 [1] : vector<8x32xf32> to vector<8xf32>
    %22 = vector.shape_cast %21 : vector<8xf32> to vector<8x1xf32>
    %23 = math.log %22 : vector<8x1xf32>
    %24 = vector.broadcast %23 : vector<8x1xf32> to vector<8x32xf32>
    %25 = arith.subf %19, %24 : vector<8x32xf32>
    %26 = arith.subf %25, %15 : vector<8x32xf32>
    %27 = arith.mulf %20, %26 : vector<8x32xf32>
    %cst_8 = arith.constant dense<0.000000e+00> : vector<8xf32>
    %28 = vector.multi_reduction <add>, %27, %cst_8 [1] : vector<8x32xf32> to vector<8xf32>
    %29 = vector.shape_cast %28 : vector<8xf32> to vector<8x1xf32>
    %30 = arith.divf %29, %22 : vector<8x1xf32>
    %31 = tpu.iota {dimensions = array<i32: 0>} : vector<8x1xi32>
    %c8_i32 = arith.constant 8 : i32
    %32 = arith.muli %arg0, %c8_i32 : i32
    %33 = vector.broadcast %32 : i32 to vector<8x1xi32>
    %34 = arith.addi %31, %33 : vector<8x1xi32>
    %c8_i32_9 = arith.constant 8 : i32
    %35 = vector.broadcast %c8_i32_9 : i32 to vector<8x1xi32>
    %36 = arith.cmpi slt, %34, %35 : vector<8x1xi32>
    %cst_10 = arith.constant 0.000000e+00 : f32
    %37 = vector.broadcast %cst_10 : f32 to vector<8x1xf32>
    %38 = arith.select %36, %30, %37 : vector<8x1xi1>, vector<8x1xf32>
    %cst_11 = arith.constant dense<0.000000e+00> : vector<1xf32>
    %39 = vector.multi_reduction <add>, %38, %cst_11 [0] : vector<8x1xf32> to vector<1xf32>
    %40 = vector.shape_cast %39 : vector<1xf32> to vector<1x1xf32>
    %41 = vector.shape_cast %40 : vector<1x1xf32> to vector<1x1x1xf32>
    %c0_12 = arith.constant 0 : index
    %c0_13 = arith.constant 0 : index
    %c0_14 = arith.constant 0 : index
    %42 = vector.load %arg3[%c0_12, %c0_13, %c0_14] : memref<1x1x1xf32, #tpu.memory_space<vmem>>, vector<1x1x1xf32>
    tpu.vector_store %arg3[%c0_12, %c0_13, %c0_14], %41 {strides = array<i32>} : memref<1x1x1xf32, #tpu.memory_space<vmem>>, vector<1x1x1xf32>,
    return
  }
  func.func @transform_0(%arg0: i32) -> (i32, i32) {
    %c0_i32 = arith.constant 0 : i32
    %c0_i32_0 = arith.constant 0 : i32
    return %arg0, %c0_i32 : i32, i32
  }
  func.func @transform_1(%arg0: i32) -> (i32, i32) {
    %c0_i32 = arith.constant 0 : i32
    %c0_i32_0 = arith.constant 0 : i32
    return %arg0, %c0_i32 : i32, i32
  }
  func.func @transform_2(%arg0: i32) -> (i32, i32, i32) {
    %c0_i32 = arith.constant 0 : i32
    %c0_i32_0 = arith.constant 0 : i32
    %c0_i32_1 = arith.constant 0 : i32
    return %arg0, %c0_i32, %c0_i32_0 : i32, i32, i32
  }
}

</mosaic_0001>

<llo_original>
// kernel: tpu_custom_call.1
$region0: #{tpu_custom_call.1}
  #allocation0 [shape = 'u32[]', space=smem, size = 0x4, offset = 0x4, fixed_abs, tag = 'smem constant byte address 0x4 - core index']
  #allocation1 [shape = 'u32[144,128]{1,0:T(1,128)}', space=vmem, size = 0x12000, scoped, tag = 'internal scratch']
  %s0 = inlined_call_operand.hbm [shape: f32[8,32], index: 0, kind: input, shape index: {}]
  %s1 = inlined_call_operand.hbm [shape: f32[8,32], index: 1, kind: input, shape index: {}]
  %s2 = inlined_call_operand.hbm [shape: f32[1,1,1], index: 2, kind: output, shape index: {}]
  %s3 = sld [smem:[#allocation0]]
  $region26: #{tpu_custom_call.1} parent=0
    _
  %s5 = ssub.s32 1, %s3
  %s6 = scalar_select 0, %s5, %s3
  $region1: #{tpu_custom_call.1} parent=0
    #allocation2 [shape = 'u8[4096]{0}', space=vmem, size = 0x1000, scoped, tag = 'input window, operand 0, single buffered']
    #allocation3 [shape = 's32[1]{0}', space=sflag, size = 0x4, scoped, tag = 'scoped memory for tpu_custom_call.1']
    #allocation4 [shape = 's32[1]{0}', space=sflag, size = 0x4, scoped, tag = 'scoped memory for tpu_custom_call.1']
    #allocation5 [shape = 'u8[4096]{0}', space=vmem, size = 0x1000, scoped, tag = 'input window, operand 1, single buffered']
    #allocation6 [shape = 's32[1]{0}', space=sflag, size = 0x4, scoped, tag = 'scoped memory for tpu_custom_call.1']
    #allocation7 [shape = 'u8[512]{0}', space=vmem, size = 0x400, scoped, tag = 'output window, operand 0, single buffered']
    %7 = vsyncpa [#allocation3], 0
    %8 = vsyncpa [#allocation6], 0
    %9 = vsyncpa [#allocation4], 0
    // Predicated region
    $region2: #{tpu_custom_call.1} parent=1 // pred_check
      _
    $region3: #{tpu_custom_call.1} parent=1 // pred_check_branch
      %11 = sbr.rel (0) target = $region5
    $region4: #{tpu_custom_call.1} parent=1 // pred_region
      %s13 = ssub.s32 128, 128
      %14 = vsyncadd [#allocation3], %s13
      %s16 = sshll.u32 [#allocation2], 4
      %s17 = int_to_ptr.vmem [resolvable:$true] %s16
      %19 = dma.hbm_to_vmem [thread:$0]  %s0, 128, %s17, [#allocation3]
    $region5: #{tpu_custom_call.1} parent=1 // pred_fallthru
      _
    // Predicated region
    $region6: #{tpu_custom_call.1} parent=1 // pred_check
      _
    $region7: #{tpu_custom_call.1} parent=1 // pred_check_branch
      %21 = sbr.rel (0) target = $region9
    $region8: #{tpu_custom_call.1} parent=1 // pred_region
      %s23 = ssub.s32 128, 128
      %24 = vsyncadd [#allocation6], %s23
      %s26 = sshll.u32 [#allocation5], 4
      %s27 = int_to_ptr.vmem [resolvable:$true] %s26
      %29 = dma.hbm_to_vmem [thread:$0]  %s1, 128, %s27, [#allocation6]
    $region9: #{tpu_custom_call.1} parent=1 // pred_fallthru
      _
    // Predicated region
    $region10: #{tpu_custom_call.1} parent=1 // pred_check
      _
    $region11: #{tpu_custom_call.1} parent=1 // pred_check_branch
      %31 = sbr.rel (0) target = $region13
    $region12: #{tpu_custom_call.1} parent=1 // pred_region
      %32 = dma.done [#allocation3], 128
    $region13: #{tpu_custom_call.1} parent=1 // pred_fallthru
      _
    // Predicated region
    $region14: #{tpu_custom_call.1} parent=1 // pred_check
      _
    $region15: #{tpu_custom_call.1} parent=1 // pred_check_branch
      %34 = sbr.rel (0) target = $region17
    $region16: #{tpu_custom_call.1} parent=1 // pred_region
      %35 = dma.done [#allocation6], 128
    $region17: #{tpu_custom_call.1} parent=1 // pred_fallthru
      _
    %v36 = vld [vmem:[#allocation2] sm:$0xff]
    %v37 = vmul.f32 %v36, 0.5
    %v38 = vld [vmem:[#allocation5] sm:$0xff]
    %v39 = vmul.f32 %v38, 0.5
    %vm40 = vcmask 261120
    %v41 = vsel %vm40, %v37, -inf
    %42 = vmax.xlane.f32.xlu0 %v41
    %v43 = vpop.xlane.xlu0 %42
    %v44 = vsub.f32 %v37, %v43
    %v45 = vmul.f32 %v44, 1.442695
    %v46 = vpow.pop %v45
    %v47 = vsel %vm40, %v46, 0.0
    %48 = vadd.xlane.f32.xlu0 %v47
    %v49 = vpop.xlane.xlu0 %48
    %v50 = vlog2.pop %v49
    %v51 = vmul.f32 %v50, 0.6931472
    %v52 = vsub.f32 %v44, %v51
    %v53 = vsel %vm40, %v39, -inf
    %54 = vmax.xlane.f32.xlu0 %v53
    %v55 = vpop.xlane.xlu0 %54
    %v56 = vsub.f32 %v39, %v55
    %v57 = vmul.f32 %v56, 1.442695
    %v58 = vpow.pop %v57
    %v59 = vsel %vm40, %v58, 0.0
    %60 = vadd.xlane.f32.xlu0 %v59
    %v61 = vpop.xlane.xlu0 %60
    %v62 = vlog2.pop %v61
    %v63 = vmul.f32 %v62, 0.6931472
    %v64 = vsub.f32 %v56, %v63
    %v65 = vsub.f32 %v64, %v52
    %v66 = vmul.f32 %v58, %v65
    %v67 = vsel %vm40, %v66, 0.0
    %68 = vadd.xlane.f32.xlu0 %v67
    %v69 = vpop.xlane.xlu0 %68
    %v70 = vrcp.pop %v61
    %v71 = vmul.f32 %v69, %v70
    %v72 = vlaneseq
    %v73 = vshrl.u32 %v72, 7
    %s74 = smul.u32 0, 8
    %v75 = vstv %s74
    %v76 = vadd.s32 %v73, %v75
    %vm77 = vcmp.lt.s32.totalorder %v76, 8
    %v78 = vsel %vm77, %v71, 0.0
    %v79 = vrot.slane %v78, 4
    %v80 = vadd.f32 %v78, %v79
    %v81 = vrot.slane %v80, 2
    %v82 = vadd.f32 %v80, %v81
    %v83 = vrot.slane %v82, 1
    %v84 = vadd.f32 %v82, %v83
    %vm85 = vcmask 0
    %86 = vst.msk [vmem:[#allocation7] sm:$0x1] %vm85, %v84
    // Predicated region
    $region18: #{tpu_custom_call.1} parent=1 // pred_check
      _
    $region19: #{tpu_custom_call.1} parent=1 // pred_check_branch
      %88 = sbr.rel (0) target = $region21
    $region20: #{tpu_custom_call.1} parent=1 // pred_region
      %s90 = ssub.s32 16, 16
      %91 = vsyncadd [#allocation4], %s90
      %s93 = sshll.u32 [#allocation7], 4
      %s94 = int_to_ptr.vmem [resolvable:$true] %s93
      %96 = dma.vmem_to_hbm [thread:$0]  %s94, 16, %s2, [#allocation4]
    $region21: #{tpu_custom_call.1} parent=1 // pred_fallthru
      _
    // Predicated region
    $region22: #{tpu_custom_call.1} parent=1 // pred_check
      _
    $region23: #{tpu_custom_call.1} parent=1 // pred_check_branch
      %98 = sbr.rel (0) target = $region25
    $region24: #{tpu_custom_call.1} parent=1 // pred_region
      %99 = dma.done [#allocation4], 16
    $region25: #{tpu_custom_call.1} parent=1 // pred_fallthru
      _
    %100 = vsyncpa [#allocation3], 1
    %101 = vsyncpa [#allocation6], 1
    %102 = vsyncpa [#allocation4], 1

</llo_original>
